<compile_context>
chip_gen: v7x
topology: tpu7x:2x2x1
jax: 0.10.0
libtpu: 0.0.40
codegen_flags: <defaults>
</compile_context>

<pallas_src>
import functools

import jax
import jax.numpy as jnp
from jax.experimental import pallas as pl
from jax.experimental.pallas import tpu as pltpu

LANES = 128
SUBLANES = 8


def _iou_kernel(logits_ref, targets_ref, a_out, b_out, c_out,
                a_acc, b_acc, c_acc, *,
                tiles_per_core, total_tiles, tile_rows, last_tile_rows,
                rows_per_chunk, has_overhang):
    core = pl.program_id(0)   # TensorCore split axis ("parallel")
    i = pl.program_id(1)      # streaming/reduction axis ("arbitrary")

    @pl.when(i == 0)
    def _init():
        a_acc[...] = jnp.zeros_like(a_acc)
        b_acc[...] = jnp.zeros_like(b_acc)
        c_acc[...] = jnp.zeros_like(c_acc)

    tile_idx = core * tiles_per_core + i

    def _accum(th, t):
        # Keep accumulation vreg-shaped: reduce only over the leading axis
        # (pure VPU adds); the cross-lane/sublane reduce happens in the
        # wrapper on tiny (8,128) partials.
        sub = th.shape[0] // SUBLANES
        th3 = th.reshape(sub, SUBLANES, LANES)
        t3 = t.reshape(sub, SUBLANES, LANES)
        a_acc[...] += jnp.sum(th3 * t3, axis=0)   # A partial
        b_acc[...] += jnp.sum(th3, axis=0)        # B partial
        c_acc[...] += jnp.sum(t3, axis=0)         # C partial

    def accumulate_full():
        n_chunks = tile_rows // rows_per_chunk

        def chunk(r0):
            x = logits_ref[pl.ds(r0, rows_per_chunk), :].astype(jnp.float32)
            t = targets_ref[pl.ds(r0, rows_per_chunk), :].astype(jnp.float32)
            _accum(jnp.tanh(0.5 * x), t)          # one EUP transcendental/elem

        if n_chunks == 1:
            chunk(0)
        else:
            def body(c, carry):
                chunk(pl.multiple_of(c * rows_per_chunk, rows_per_chunk))
                return carry
            jax.lax.fori_loop(0, n_chunks, body, 0, unroll=True)

    def accumulate_masked_last():
        # Only the single partial last tile pays for a (row-only) mask; the
        # out-of-bounds rows of the block contain unspecified data.
        x = logits_ref[...].astype(jnp.float32)
        t = targets_ref[...].astype(jnp.float32)
        row = jax.lax.broadcasted_iota(jnp.int32, (tile_rows, LANES), 0)
        valid = row < last_tile_rows
        th = jnp.where(valid, jnp.tanh(0.5 * x), 0.0)
        t = jnp.where(valid, t, 0.0)
        _accum(th, t)

    partial_last = last_tile_rows != tile_rows

    if not partial_last and not has_overhang:
        # Fast path: every grid step is a full, valid tile.  No masks, no
        # guards -- ~5 VPU ops + 1 EUP op per element.
        accumulate_full()
    else:
        full_limit = total_tiles - 1 if partial_last else total_tiles

        @pl.when(tile_idx < full_limit)
        def _full():
            accumulate_full()

        if partial_last:
            @pl.when(tile_idx == total_tiles - 1)
            def _last():
                accumulate_masked_last()
        # tile_idx >= total_tiles (overhang on the last core) is skipped.

    @pl.when(i == pl.num_programs(1) - 1)
    def _flush():
        a_out[...] = a_acc[...]
        b_out[...] = b_acc[...]
        c_out[...] = c_acc[...]


def _detect_num_tensorcores():
    """TensorCores per chip: 2 on v7x, 1 on v5e/v6e (best effort, safe fallback)."""
    try:
        kind = jax.devices()[0].device_kind.lower()
        if "v7" in kind:
            return 2
    except Exception:
        pass
    return 1


def iou_loss(logits, targets, smooth=1e-4, num_cores=None,
             target_step_bytes=4 * 1024 * 1024):
    """Pallas TPU implementation of IoULoss.forward (returns a scalar f32)."""
    n = logits.size
    lf = logits.reshape(-1)     # reshape only: no dtype cast in the wrapper
    tf = targets.reshape(-1)

    chunk_elems = SUBLANES * LANES          # 1024
    padded = pl.cdiv(n, chunk_elems) * chunk_elems
    if padded != n:
        # TODO(synk): this rare ragged-tail fallback still pays a full pad
        # copy; a zero-copy tail needs a manual-DMA kernel on the flat array.
        # The zero padding self-masks (tanh(0)=0, t=0), so no in-kernel mask.
        lf = jnp.pad(lf, (0, padded - n))
        tf = jnp.pad(tf, (0, padded - n))

    rows = padded // LANES                  # multiple of 8
    lf = lf.reshape(rows, LANES)            # lane-dense slab, native dtype
    tf = tf.reshape(rows, LANES)

    # Byte-based tile sizing: ~target_step_bytes of combined input per grid
    # step (amortizes the ~0.35us/step overhead); rows stay a multiple of 8.
    row_bytes = LANES * (lf.dtype.itemsize + tf.dtype.itemsize)
    tile_rows = max(SUBLANES,
                    (target_step_bytes // row_bytes) // SUBLANES * SUBLANES)
    tile_rows = min(tile_rows, rows)

    total_tiles = pl.cdiv(rows, tile_rows)
    last_tile_rows = rows - (total_tiles - 1) * tile_rows

    if num_cores is None:
        num_cores = _detect_num_tensorcores()
    num_cores = max(1, min(num_cores, total_tiles))
    tiles_per_core = pl.cdiv(total_tiles, num_cores)
    has_overhang = num_cores * tiles_per_core > total_tiles

    # In-tile chunking keeps intermediates in vregs instead of MiB temporaries.
    rows_per_chunk = 512 if tile_rows % 512 == 0 else tile_rows

    def in_map(c, i):
        # Clamp: overhang tiles on the last core re-read the final block; the
        # kernel's pl.when guard (unclamped tile index) skips their compute.
        return (jnp.minimum(c * tiles_per_core + i, total_tiles - 1), 0)

    kernel = functools.partial(
        _iou_kernel,
        tiles_per_core=tiles_per_core, total_tiles=total_tiles,
        tile_rows=tile_rows, last_tile_rows=last_tile_rows,
        rows_per_chunk=rows_per_chunk, has_overhang=has_overhang)

    part_shape = jax.ShapeDtypeStruct((num_cores, SUBLANES, LANES), jnp.float32)
    out_spec = pl.BlockSpec((None, SUBLANES, LANES), lambda c, i: (c, 0, 0))

    a_part, b_part, c_part = pl.pallas_call(
        kernel,
        out_shape=(part_shape, part_shape, part_shape),
        grid_spec=pltpu.PrefetchScalarGridSpec(
            num_scalar_prefetch=0,
            grid=(num_cores, tiles_per_core),
            in_specs=[
                pl.BlockSpec((tile_rows, LANES), in_map),
                pl.BlockSpec((tile_rows, LANES), in_map),
            ],
            out_specs=(out_spec, out_spec, out_spec),
            scratch_shapes=[pltpu.VMEM((SUBLANES, LANES), jnp.float32)] * 3,
        ),
        compiler_params=pltpu.CompilerParams(
            # If xprof on v7x shows the leading axis not sharding across the
            # two TCs, switch axis 0 to pltpu.CORE_PARALLEL.
            dimension_semantics=(
                ("parallel" if num_cores > 1 else "arbitrary"), "arbitrary"),
            vmem_limit_bytes=48 * 1024 * 1024,
        ),
    )(lf, tf)

    # Tiny epilogue: combine per-core (8,128) partials and apply the hoisted
    # sigmoid affine conf = 0.5*tanh(0.5*x) + 0.5:
    #   inter     = sum(conf * t) = 0.5*A + 0.5*C
    #   sum(conf) = 0.5*B + 0.5*n      (true n: zero padding self-masks)
    A = jnp.sum(a_part)
    B = jnp.sum(b_part)
    C = jnp.sum(c_part)
    inter = 0.5 * A + 0.5 * C
    total = 0.5 * B + 0.5 * n + C
    union = total - inter
    return 1.0 - (inter + smooth) / (union + smooth)


def _iou_loss_ref(logits, targets, smooth=1e-4):
    c = jax.nn.sigmoid(logits.astype(jnp.float32))
    t = targets.astype(jnp.float32)
    inter = jnp.sum(c * t)
    total = jnp.sum(c + t)
    union = total - inter
    return 1.0 - (inter + smooth) / (union + smooth)


if __name__ == "__main__":
    key = jax.random.PRNGKey(0)
    k1, k2 = jax.random.split(key)

    # Small NCHW-shaped inputs consistent with a segmentation loss.
    logits = jax.random.normal(k1, (2, 4, 16, 16), dtype=jnp.float32)
    targets = (jax.random.uniform(k2, (2, 4, 16, 16)) > 0.5).astype(jnp.float32)

    loss = iou_loss(logits, targets, smooth=1e-4)
    loss = jax.block_until_ready(loss)

    ref = _iou_loss_ref(logits, targets, smooth=1e-4)
    assert jnp.allclose(loss, ref, atol=1e-5, rtol=1e-5), (loss, ref)

    print("KERNEL_OK")
</pallas_src>

<mosaic_0001>
module attributes {stable_mosaic.version = 11 : i64} {
  func.func @_iou_kernel(%arg0: i32, %arg1: i32, %arg2: memref<16x128xf32, #tpu.memory_space<vmem>>, %arg3: memref<16x128xf32, #tpu.memory_space<vmem>>, %arg4: memref<1x8x128xf32, #tpu.memory_space<vmem>>, %arg5: memref<1x8x128xf32, #tpu.memory_space<vmem>>, %arg6: memref<1x8x128xf32, #tpu.memory_space<vmem>>, %arg7: memref<8x128xf32, #tpu.memory_space<vmem>>, %arg8: memref<8x128xf32, #tpu.memory_space<vmem>>, %arg9: memref<8x128xf32, #tpu.memory_space<vmem>>) attributes {dimension_semantics = [#tpu.dimension_semantics<arbitrary>, #tpu.dimension_semantics<arbitrary>], iteration_bounds = array<i64: 1, 1>, scalar_prefetch = 0 : i64, scratch_operands = 3 : i64, tpu.core_type = #tpu.core_type<tc>, window_params = [{transform_indices = @transform_0, window_bounds = array<i64: 16, 128>}, {transform_indices = @transform_1, window_bounds = array<i64: 16, 128>}, {transform_indices = @transform_2, window_bounds = array<i64: 1, 8, 128>}, {transform_indices = @transform_3, window_bounds = array<i64: 1, 8, 128>}, {transform_indices = @transform_4, window_bounds = array<i64: 1, 8, 128>}]} {
    %c0_i32 = arith.constant 0 : i32
    %0 = arith.cmpi eq, %arg1, %c0_i32 : i32
    %1 = arith.extui %0 : i1 to i32
    %c0_i32_0 = arith.constant 0 : i32
    %2 = arith.cmpi ne, %1, %c0_i32_0 : i32
    scf.if %2 {
      %cst_21 = arith.constant 0.000000e+00 : f32
      %26 = vector.broadcast %cst_21 : f32 to vector<8x128xf32>
      %c0_22 = arith.constant 0 : index
      %c0_23 = arith.constant 0 : index
      %27 = vector.load %arg7[%c0_22, %c0_23] : memref<8x128xf32, #tpu.memory_space<vmem>>, vector<8x128xf32>
      tpu.vector_store %arg7[%c0_22, %c0_23], %26 {strides = array<i32>} : memref<8x128xf32, #tpu.memory_space<vmem>>, vector<8x128xf32>,
      %cst_24 = arith.constant 0.000000e+00 : f32
      %28 = vector.broadcast %cst_24 : f32 to vector<8x128xf32>
      %c0_25 = arith.constant 0 : index
      %c0_26 = arith.constant 0 : index
      %29 = vector.load %arg8[%c0_25, %c0_26] : memref<8x128xf32, #tpu.memory_space<vmem>>, vector<8x128xf32>
      tpu.vector_store %arg8[%c0_25, %c0_26], %28 {strides = array<i32>} : memref<8x128xf32, #tpu.memory_space<vmem>>, vector<8x128xf32>,
      %cst_27 = arith.constant 0.000000e+00 : f32
      %30 = vector.broadcast %cst_27 : f32 to vector<8x128xf32>
      %c0_28 = arith.constant 0 : index
      %c0_29 = arith.constant 0 : index
      %31 = vector.load %arg9[%c0_28, %c0_29] : memref<8x128xf32, #tpu.memory_space<vmem>>, vector<8x128xf32>
      tpu.vector_store %arg9[%c0_28, %c0_29], %30 {strides = array<i32>} : memref<8x128xf32, #tpu.memory_space<vmem>>, vector<8x128xf32>,
    } else {
    }
    %c0 = arith.constant 0 : index
    %c0_1 = arith.constant 0 : index
    %3 = vector.load %arg2[%c0, %c0_1] : memref<16x128xf32, #tpu.memory_space<vmem>>, vector<16x128xf32>
    %c0_2 = arith.constant 0 : index
    %c0_3 = arith.constant 0 : index
    %4 = vector.load %arg3[%c0_2, %c0_3] : memref<16x128xf32, #tpu.memory_space<vmem>>, vector<16x128xf32>
    %cst = arith.constant 5.000000e-01 : f32
    %5 = vector.broadcast %cst : f32 to vector<16x128xf32>
    %6 = arith.mulf %5, %3 : vector<16x128xf32>
    %7 = math.tanh %6 : vector<16x128xf32>
    %8 = vector.shape_cast %7 : vector<16x128xf32> to vector<2x8x128xf32>
    %9 = vector.shape_cast %4 : vector<16x128xf32> to vector<2x8x128xf32>
    %c0_4 = arith.constant 0 : index
    %c0_5 = arith.constant 0 : index
    %10 = vector.load %arg7[%c0_4, %c0_5] : memref<8x128xf32, #tpu.memory_space<vmem>>, vector<8x128xf32>
    %11 = arith.mulf %8, %9 : vector<2x8x128xf32>
    %cst_6 = arith.constant dense<0.000000e+00> : vector<8x128xf32>
    %12 = vector.multi_reduction <add>, %11, %cst_6 [0] : vector<2x8x128xf32> to vector<8x128xf32>
    %13 = arith.addf %10, %12 : vector<8x128xf32>
    %c0_7 = arith.constant 0 : index
    %c0_8 = arith.constant 0 : index
    %14 = vector.load %arg7[%c0_7, %c0_8] : memref<8x128xf32, #tpu.memory_space<vmem>>, vector<8x128xf32>
    tpu.vector_store %arg7[%c0_7, %c0_8], %13 {strides = array<i32>} : memref<8x128xf32, #tpu.memory_space<vmem>>, vector<8x128xf32>,
    %c0_9 = arith.constant 0 : index
    %c0_10 = arith.constant 0 : index
    %15 = vector.load %arg8[%c0_9, %c0_10] : memref<8x128xf32, #tpu.memory_space<vmem>>, vector<8x128xf32>
    %cst_11 = arith.constant dense<0.000000e+00> : vector<8x128xf32>
    %16 = vector.multi_reduction <add>, %8, %cst_11 [0] : vector<2x8x128xf32> to vector<8x128xf32>
    %17 = arith.addf %15, %16 : vector<8x128xf32>
    %c0_12 = arith.constant 0 : index
    %c0_13 = arith.constant 0 : index
    %18 = vector.load %arg8[%c0_12, %c0_13] : memref<8x128xf32, #tpu.memory_space<vmem>>, vector<8x128xf32>
    tpu.vector_store %arg8[%c0_12, %c0_13], %17 {strides = array<i32>} : memref<8x128xf32, #tpu.memory_space<vmem>>, vector<8x128xf32>,
    %c0_14 = arith.constant 0 : index
    %c0_15 = arith.constant 0 : index
    %19 = vector.load %arg9[%c0_14, %c0_15] : memref<8x128xf32, #tpu.memory_space<vmem>>, vector<8x128xf32>
    %cst_16 = arith.constant dense<0.000000e+00> : vector<8x128xf32>
    %20 = vector.multi_reduction <add>, %9, %cst_16 [0] : vector<2x8x128xf32> to vector<8x128xf32>
    %21 = arith.addf %19, %20 : vector<8x128xf32>
    %c0_17 = arith.constant 0 : index
    %c0_18 = arith.constant 0 : index
    %22 = vector.load %arg9[%c0_17, %c0_18] : memref<8x128xf32, #tpu.memory_space<vmem>>, vector<8x128xf32>
    tpu.vector_store %arg9[%c0_17, %c0_18], %21 {strides = array<i32>} : memref<8x128xf32, #tpu.memory_space<vmem>>, vector<8x128xf32>,
    %c0_i32_19 = arith.constant 0 : i32
    %23 = arith.cmpi eq, %arg1, %c0_i32_19 : i32
    %24 = arith.extui %23 : i1 to i32
    %c0_i32_20 = arith.constant 0 : i32
    %25 = arith.cmpi ne, %24, %c0_i32_20 : i32
    scf.if %25 {
      %c0_21 = arith.constant 0 : index
      %c0_22 = arith.constant 0 : index
      %26 = vector.load %arg7[%c0_21, %c0_22] : memref<8x128xf32, #tpu.memory_space<vmem>>, vector<8x128xf32>
      %c0_23 = arith.constant 0 : index
      %c0_24 = arith.constant 0 : index
      %c0_25 = arith.constant 0 : index
      %27 = vector.load %arg4[%c0_23, %c0_24, %c0_25] : memref<1x8x128xf32, #tpu.memory_space<vmem>>, vector<1x8x128xf32>
      %28 = vector.shape_cast %27 : vector<1x8x128xf32> to vector<8x128xf32>
      %29 = vector.shape_cast %26 : vector<8x128xf32> to vector<1x8x128xf32>
      tpu.vector_store %arg4[%c0_23, %c0_24, %c0_25], %29 {strides = array<i32>} : memref<1x8x128xf32, #tpu.memory_space<vmem>>, vector<1x8x128xf32>,
      %c0_26 = arith.constant 0 : index
      %c0_27 = arith.constant 0 : index
      %30 = vector.load %arg8[%c0_26, %c0_27] : memref<8x128xf32, #tpu.memory_space<vmem>>, vector<8x128xf32>
      %c0_28 = arith.constant 0 : index
      %c0_29 = arith.constant 0 : index
      %c0_30 = arith.constant 0 : index
      %31 = vector.load %arg5[%c0_28, %c0_29, %c0_30] : memref<1x8x128xf32, #tpu.memory_space<vmem>>, vector<1x8x128xf32>
      %32 = vector.shape_cast %31 : vector<1x8x128xf32> to vector<8x128xf32>
      %33 = vector.shape_cast %30 : vector<8x128xf32> to vector<1x8x128xf32>
      tpu.vector_store %arg5[%c0_28, %c0_29, %c0_30], %33 {strides = array<i32>} : memref<1x8x128xf32, #tpu.memory_space<vmem>>, vector<1x8x128xf32>,
      %c0_31 = arith.constant 0 : index
      %c0_32 = arith.constant 0 : index
      %34 = vector.load %arg9[%c0_31, %c0_32] : memref<8x128xf32, #tpu.memory_space<vmem>>, vector<8x128xf32>
      %c0_33 = arith.constant 0 : index
      %c0_34 = arith.constant 0 : index
      %c0_35 = arith.constant 0 : index
      %35 = vector.load %arg6[%c0_33, %c0_34, %c0_35] : memref<1x8x128xf32, #tpu.memory_space<vmem>>, vector<1x8x128xf32>
      %36 = vector.shape_cast %35 : vector<1x8x128xf32> to vector<8x128xf32>
      %37 = vector.shape_cast %34 : vector<8x128xf32> to vector<1x8x128xf32>
      tpu.vector_store %arg6[%c0_33, %c0_34, %c0_35], %37 {strides = array<i32>} : memref<1x8x128xf32, #tpu.memory_space<vmem>>, vector<1x8x128xf32>,
    } else {
    }
    return
  }
  func.func @transform_0(%arg0: i32, %arg1: i32) -> (i32, i32) {
    %c1_i32 = arith.constant 1 : i32
    %0 = arith.muli %arg0, %c1_i32 : i32
    %1 = arith.addi %0, %arg1 : i32
    %c0_i32 = arith.constant 0 : i32
    %2 = arith.minsi %1, %c0_i32 : i32
    %c0_i32_0 = arith.constant 0 : i32
    %c0_i32_1 = arith.constant 0 : i32
    return %2, %c0_i32_0 : i32, i32
  }
  func.func @transform_1(%arg0: i32, %arg1: i32) -> (i32, i32) {
    %c1_i32 = arith.constant 1 : i32
    %0 = arith.muli %arg0, %c1_i32 : i32
    %1 = arith.addi %0, %arg1 : i32
    %c0_i32 = arith.constant 0 : i32
    %2 = arith.minsi %1, %c0_i32 : i32
    %c0_i32_0 = arith.constant 0 : i32
    %c0_i32_1 = arith.constant 0 : i32
    return %2, %c0_i32_0 : i32, i32
  }
  func.func @transform_2(%arg0: i32, %arg1: i32) -> (i32, i32, i32) {
    %c0_i32 = arith.constant 0 : i32
    %c0_i32_0 = arith.constant 0 : i32
    %c0_i32_1 = arith.constant 0 : i32
    return %arg0, %c0_i32, %c0_i32_0 : i32, i32, i32
  }
  func.func @transform_3(%arg0: i32, %arg1: i32) -> (i32, i32, i32) {
    %c0_i32 = arith.constant 0 : i32
    %c0_i32_0 = arith.constant 0 : i32
    %c0_i32_1 = arith.constant 0 : i32
    return %arg0, %c0_i32, %c0_i32_0 : i32, i32, i32
  }
  func.func @transform_4(%arg0: i32, %arg1: i32) -> (i32, i32, i32) {
    %c0_i32 = arith.constant 0 : i32
    %c0_i32_0 = arith.constant 0 : i32
    %c0_i32_1 = arith.constant 0 : i32
    return %arg0, %c0_i32, %c0_i32_0 : i32, i32, i32
  }
}

</mosaic_0001>

<llo_original>
// kernel: tpu_custom_call.1
$region0: #{tpu_custom_call.1}
  #allocation0 [shape = 'u32[]', space=smem, size = 0x4, offset = 0x4, fixed_abs, tag = 'smem constant byte address 0x4 - core index']
  #allocation1 [shape = 'u32[144,128]{1,0:T(1,128)}', space=vmem, size = 0x12000, scoped, tag = 'internal scratch']
  #allocation2 [shape = 'f32[8,128]{1,0:T(8,128)}', space=vmem, size = 0x1000, scoped, tag = 'scratch operand']
  #allocation3 [shape = 'f32[8,128]{1,0:T(8,128)}', space=vmem, size = 0x1000, scoped, tag = 'scratch operand']
  #allocation4 [shape = 'f32[8,128]{1,0:T(8,128)}', space=vmem, size = 0x1000, scoped, tag = 'scratch operand']
  %s0 = inlined_call_operand.hbm [shape: f32[16,128], index: 0, kind: input, shape index: {}]
  %s1 = inlined_call_operand.hbm [shape: f32[16,128], index: 1, kind: input, shape index: {}]
  %s2 = inlined_call_operand.hbm [shape: f32[1,8,128], index: 2, kind: output, shape index: {0}]
  %s3 = inlined_call_operand.hbm [shape: f32[1,8,128], index: 3, kind: output, shape index: {1}]
  %s4 = inlined_call_operand.hbm [shape: f32[1,8,128], index: 4, kind: output, shape index: {2}]
  %5 = xla_tuple %s2, %s3, %s4
  %s6 = sld [smem:[#allocation0]]
  $region50: #{tpu_custom_call.1} parent=0
    _
  %s8 = ssub.s32 1, %s6
  %s9 = scalar_select 0, %s8, %s6
  $region1: #{tpu_custom_call.1} parent=0
    #allocation5 [shape = 'u8[8192]{0}', space=vmem, size = 0x2000, scoped, tag = 'input window, operand 0, single buffered']
    #allocation6 [shape = 's32[1]{0}', space=sflag, size = 0x4, scoped, tag = 'scoped memory for tpu_custom_call.1']
    #allocation7 [shape = 's32[1]{0}', space=sflag, size = 0x4, scoped, tag = 'scoped memory for tpu_custom_call.1']
    #allocation8 [shape = 'u8[8192]{0}', space=vmem, size = 0x2000, scoped, tag = 'input window, operand 1, single buffered']
    #allocation9 [shape = 's32[1]{0}', space=sflag, size = 0x4, scoped, tag = 'scoped memory for tpu_custom_call.1']
    #allocation10 [shape = 'u8[4096]{0}', space=vmem, size = 0x1000, scoped, tag = 'output window, operand 0, single buffered']
    #allocation11 [shape = 'u8[4096]{0}', space=vmem, size = 0x1000, scoped, tag = 'output window, operand 1, single buffered']
    #allocation12 [shape = 's32[1]{0}', space=sflag, size = 0x4, scoped, tag = 'scoped memory for tpu_custom_call.1']
    #allocation13 [shape = 'u8[4096]{0}', space=vmem, size = 0x1000, scoped, tag = 'output window, operand 2, single buffered']
    %10 = vsyncpa [#allocation6], 0
    %11 = vsyncpa [#allocation9], 0
    %12 = vsyncpa [#allocation7], 0
    %13 = vsyncpa [#allocation12], 0
    // Predicated region
    $region2: #{tpu_custom_call.1} parent=1 // pred_check
      _
    $region3: #{tpu_custom_call.1} parent=1 // pred_check_branch
      %15 = sbr.rel (0) target = $region5
    $region4: #{tpu_custom_call.1} parent=1 // pred_region
      %s16 = sadd.s32 0, 0
      %p17 = scmp.lt.s32.totalorder %s16, 0
      %s18 = scalar_select %p17, %s16, 0
      %s19 = smul.u32 2, %s18
      %s21 = ssub.s32 256, 256
      %22 = vsyncadd [#allocation6], %s21
      %s23 = smul.addr %s19, 128
      %s24 = scalar_lea.hbm %s0, %s23
      %s25 = sshll.u32 [#allocation5], 4
      %s26 = int_to_ptr.vmem [resolvable:$true] %s25
      %31 = dma.hbm_to_vmem [thread:$0]  %s24, 256, %s26, [#allocation6], 128, 128, 8
    $region5: #{tpu_custom_call.1} parent=1 // pred_fallthru
      _
    // Predicated region
    $region6: #{tpu_custom_call.1} parent=1 // pred_check
      _
    $region7: #{tpu_custom_call.1} parent=1 // pred_check_branch
      %33 = sbr.rel (0) target = $region9
    $region8: #{tpu_custom_call.1} parent=1 // pred_region
      %s34 = sadd.s32 0, 0
      %p35 = scmp.lt.s32.totalorder %s34, 0
      %s36 = scalar_select %p35, %s34, 0
      %s37 = smul.u32 2, %s36
      %s39 = ssub.s32 256, 256
      %40 = vsyncadd [#allocation9], %s39
      %s41 = smul.addr %s37, 128
      %s42 = scalar_lea.hbm %s1, %s41
      %s43 = sshll.u32 [#allocation8], 4
      %s44 = int_to_ptr.vmem [resolvable:$true] %s43
      %49 = dma.hbm_to_vmem [thread:$0]  %s42, 256, %s44, [#allocation9], 128, 128, 8
    $region9: #{tpu_custom_call.1} parent=1 // pred_fallthru
      _
    // Predicated region
    $region10: #{tpu_custom_call.1} parent=1 // pred_check
      _
    $region11: #{tpu_custom_call.1} parent=1 // pred_check_branch
      %51 = sbr.rel (0) target = $region13
    $region12: #{tpu_custom_call.1} parent=1 // pred_region
      %52 = dma.done [#allocation6], 256
    $region13: #{tpu_custom_call.1} parent=1 // pred_fallthru
      _
    // Predicated region
    $region14: #{tpu_custom_call.1} parent=1 // pred_check
      _
    $region15: #{tpu_custom_call.1} parent=1 // pred_check_branch
      %54 = sbr.rel (0) target = $region17
    $region16: #{tpu_custom_call.1} parent=1 // pred_region
      %55 = dma.done [#allocation9], 256
    $region17: #{tpu_custom_call.1} parent=1 // pred_fallthru
      _
    %s56 = sadd.s32 0, 0
    %p57 = scmp.lt.s32.totalorder %s56, 0
    %s58 = scalar_select %p57, %s56, 0
    %s59 = smul.u32 2, %s58
    %s60 = sadd.s32 0, 0
    %p61 = scmp.lt.s32.totalorder %s60, 0
    %s62 = scalar_select %p61, %s60, 0
    %s63 = smul.u32 2, %s62
    %p64 = scmp.eq.s32.totalorder 0, 0
    // Predicated region
    $region18: #{tpu_custom_call.1} parent=1 // pred_check
      %p65 = pneg %p64
    $region19: #{tpu_custom_call.1} parent=1 // pred_check_branch
      %67 = sbr.rel (%p65) target = $region21
    $region20: #{tpu_custom_call.1} parent=1 // pred_region
      %68 = vst [vmem:[#allocation2] sm:$0xff] 0.0
      %69 = vst [vmem:[#allocation3] sm:$0xff] 0.0
      %70 = vst [vmem:[#allocation4] sm:$0xff] 0.0
    $region21: #{tpu_custom_call.1} parent=1 // pred_fallthru
      _
    %v71 = vld [vmem:[#allocation5] sm:$0xff]
    %v72 = vld [vmem:[#allocation5 + $0x8] sm:$0xff]
    %v73 = vld [vmem:[#allocation8] sm:$0xff]
    %v74 = vld [vmem:[#allocation8 + $0x8] sm:$0xff]
    %v75 = vmul.f32 %v71, 0.5
    %v76 = vmul.f32 %v72, 0.5
    %v77 = vtanh.pop %v75
    %v78 = vtanh.pop %v76
    %v79 = vld [vmem:[#allocation2] sm:$0xff]
    %v80 = vmul.f32 %v77, %v73
    %v81 = vmul.f32 %v78, %v74
    %v82 = vadd.f32 %v80, %v81
    %v83 = vadd.f32 %v79, %v82
    %84 = vst [vmem:[#allocation2] sm:$0xff] %v83
    %v85 = vld [vmem:[#allocation3] sm:$0xff]
    %v86 = vadd.f32 %v77, %v78
    %v87 = vadd.f32 %v85, %v86
    %88 = vst [vmem:[#allocation3] sm:$0xff] %v87
    %v89 = vld [vmem:[#allocation4] sm:$0xff]
    %v90 = vadd.f32 %v73, %v74
    %v91 = vadd.f32 %v89, %v90
    %92 = vst [vmem:[#allocation4] sm:$0xff] %v91
    // Predicated region
    $region22: #{tpu_custom_call.1} parent=1 // pred_check
      %p93 = pneg %p64
    $region23: #{tpu_custom_call.1} parent=1 // pred_check_branch
      %95 = sbr.rel (%p93) target = $region25
    $region24: #{tpu_custom_call.1} parent=1 // pred_region
      %v96 = vld [vmem:[#allocation2] sm:$0xff]
      %97 = vst [vmem:[#allocation10] sm:$0xff] %v96
      %v98 = vld [vmem:[#allocation3] sm:$0xff]
      %99 = vst [vmem:[#allocation11] sm:$0xff] %v98
      %v100 = vld [vmem:[#allocation4] sm:$0xff]
      %101 = vst [vmem:[#allocation13] sm:$0xff] %v100
    $region25: #{tpu_custom_call.1} parent=1 // pred_fallthru
      _
    // Predicated region
    $region26: #{tpu_custom_call.1} parent=1 // pred_check
      _
    $region27: #{tpu_custom_call.1} parent=1 // pred_check_branch
      %103 = sbr.rel (0) target = $region29
    $region28: #{tpu_custom_call.1} parent=1 // pred_region
      %s105 = ssub.s32 128, 128
      %106 = vsyncadd [#allocation7], %s105
      %s108 = sshll.u32 [#allocation10], 4
      %s109 = int_to_ptr.vmem [resolvable:$true] %s108
      %111 = dma.vmem_to_hbm [thread:$0]  %s109, 128, %s2, [#allocation7]
    $region29: #{tpu_custom_call.1} parent=1 // pred_fallthru
      _
    // Predicated region
    $region30: #{tpu_custom_call.1} parent=1 // pred_check
      _
    $region31: #{tpu_custom_call.1} parent=1 // pred_check_branch
      %113 = sbr.rel (0) target = $region33
    $region32: #{tpu_custom_call.1} parent=1 // pred_region
      %s115 = ssub.s32 128, 128
      %116 = vsyncadd [#allocation12], %s115
      %s118 = sshll.u32 [#allocation11], 4
      %s119 = int_to_ptr.vmem [resolvable:$true] %s118
      %121 = dma.vmem_to_hbm [thread:$0]  %s119, 128, %s3, [#allocation12]
    $region33: #{tpu_custom_call.1} parent=1 // pred_fallthru
      _
    // Predicated region
    $region34: #{tpu_custom_call.1} parent=1 // pred_check
      _
    $region35: #{tpu_custom_call.1} parent=1 // pred_check_branch
      %123 = sbr.rel (0) target = $region37
    $region36: #{tpu_custom_call.1} parent=1 // pred_region
      %s125 = ssub.s32 128, 128
      %126 = vsyncadd [#allocation12], %s125
      %s128 = sshll.u32 [#allocation13], 4
      %s129 = int_to_ptr.vmem [resolvable:$true] %s128
      %131 = dma.vmem_to_hbm [thread:$0]  %s129, 128, %s4, [#allocation12]
    $region37: #{tpu_custom_call.1} parent=1 // pred_fallthru
      _
    // Predicated region
    $region38: #{tpu_custom_call.1} parent=1 // pred_check
      _
    $region39: #{tpu_custom_call.1} parent=1 // pred_check_branch
      %133 = sbr.rel (0) target = $region41
    $region40: #{tpu_custom_call.1} parent=1 // pred_region
      %134 = dma.done [#allocation7], 128
    $region41: #{tpu_custom_call.1} parent=1 // pred_fallthru
      _
    // Predicated region
    $region42: #{tpu_custom_call.1} parent=1 // pred_check
      _
    $region43: #{tpu_custom_call.1} parent=1 // pred_check_branch
      %136 = sbr.rel (0) target = $region45
    $region44: #{tpu_custom_call.1} parent=1 // pred_region
      %137 = dma.done [#allocation12], 128
    $region45: #{tpu_custom_call.1} parent=1 // pred_fallthru
      _
    // Predicated region
    $region46: #{tpu_custom_call.1} parent=1 // pred_check
      _
    $region47: #{tpu_custom_call.1} parent=1 // pred_check_branch
      %139 = sbr.rel (0) target = $region49
    $region48: #{tpu_custom_call.1} parent=1 // pred_region
      %140 = dma.done [#allocation12], 128
    $region49: #{tpu_custom_call.1} parent=1 // pred_fallthru
      _
    %141 = vsyncpa [#allocation6], 1
    %142 = vsyncpa [#allocation9], 1
    %143 = vsyncpa [#allocation7], 1
    %144 = vsyncpa [#allocation12], 1

</llo_original>
